<compile_context>
chip_gen: v5e
topology: v5e:2x2
jax: 0.10.0
libtpu: 0.0.40
codegen_flags: <defaults>
</compile_context>

<pallas_src>
import math
import functools

import jax
import jax.numpy as jnp
from jax import lax
from jax.experimental import pallas as pl
from jax.experimental.pallas import tpu as pltpu


def _self_attention_kernel(num_heads, head_dim, compute_dtype, approx_recip,
                           has_mask, *refs):
    if has_mask:
        (q_ref, k_ref, v_ref, mask_ref,
         wq_ref, wk_ref, wv_ref, bq_ref, bk_ref, bv_ref, o_ref) = refs
    else:
        (q_ref, k_ref, v_ref,
         wq_ref, wk_ref, wv_ref, bq_ref, bk_ref, bv_ref, o_ref) = refs
        mask_ref = None

    cd = compute_dtype
    scale = 1.0 / math.sqrt(head_dim)

    # One batch element per grid step; cast MXU operands to the compute dtype.
    q_x = q_ref[0].astype(cd)          # (S, H)
    k_x = k_ref[0].astype(cd)          # (S, H)
    v_x = v_ref[0].astype(cd)          # (S, H)

    # Linear projections. Weights arrive pre-transposed (W.T) from the wrapper,
    # so the MXU consumes them directly; bias add + accumulation in f32.
    q = jnp.dot(q_x, wq_ref[...], preferred_element_type=jnp.float32) + bq_ref[...]
    k = jnp.dot(k_x, wk_ref[...], preferred_element_type=jnp.float32) + bk_ref[...]
    v = jnp.dot(v_x, wv_ref[...], preferred_element_type=jnp.float32) + bv_ref[...]

    # Fold the 1/sqrt(head_dim) scale into q once (instead of scaling every
    # (S, S) score tile per head), then drop to the compute dtype for the MXU.
    q = (q * scale).astype(cd)
    k = k.astype(cd)
    v = v.astype(cd)

    if has_mask:
        mask = mask_ref[0]             # (S, S), additive, f32

    # Contract the head_dim axes of q_h and k_h directly (q_h @ k_h.T without
    # building a transposed copy of k_h).
    dn = (((1,), (1,)), ((), ()))

    ctx_heads = []
    for h in range(num_heads):         # num_heads is a compile-time constant
        lo = h * head_dim
        hi = lo + head_dim
        qh = q[:, lo:hi]               # (S, D)
        kh = k[:, lo:hi]               # (S, D)
        vh = v[:, lo:hi]               # (S, D)

        scores = lax.dot_general(qh, kh, dn,
                                 preferred_element_type=jnp.float32)  # (S, S)
        if has_mask:
            scores = scores + mask

        # Softmax over the last axis (kept in f32).
        m = jnp.max(scores, axis=-1, keepdims=True)
        e = jnp.exp(scores - m)
        denom = jnp.sum(e, axis=-1, keepdims=True)
        probs = e * pl.reciprocal(denom, approx=approx_recip)

        ctx_heads.append(
            jnp.dot(probs.astype(cd), vh, preferred_element_type=jnp.float32))

    # Single lane-dense (S, H) store instead of num_heads narrow stores.
    o_ref[0] = jnp.concatenate(ctx_heads, axis=-1).astype(o_ref.dtype)


def self_attention(q_in, k_in, v_in, params, num_heads, attention_mask=None,
                   compute_dtype=jnp.bfloat16):
    """q_in/k_in/v_in: (B, S, H) float32. attention_mask: None or (B, S, S) additive."""
    B, S, H = q_in.shape
    assert H % num_heads == 0
    head_dim = H // num_heads

    cd = jnp.dtype(compute_dtype)
    approx_recip = (cd == jnp.dtype(jnp.bfloat16))
    has_mask = attention_mask is not None

    wq, bq, wk, bk, wv, bv = params
    # Pre-transpose (and pre-cast) the weights once at the wrapper level so the
    # kernel never builds an (H, H) transpose per grid step.
    wq_t = wq.T.astype(cd)
    wk_t = wk.T.astype(cd)
    wv_t = wv.T.astype(cd)
    bq2 = bq.reshape(1, H).astype(jnp.float32)
    bk2 = bk.reshape(1, H).astype(jnp.float32)
    bv2 = bv.reshape(1, H).astype(jnp.float32)

    kernel = functools.partial(_self_attention_kernel, num_heads, head_dim,
                               cd, approx_recip, has_mask)

    act_spec = pl.BlockSpec((1, S, H), lambda b: (b, 0, 0))
    w_spec = pl.BlockSpec((H, H), lambda b: (0, 0))
    b_spec = pl.BlockSpec((1, H), lambda b: (0, 0))

    in_specs = [act_spec, act_spec, act_spec]
    args = [q_in, k_in, v_in]
    if has_mask:
        in_specs.append(pl.BlockSpec((1, S, S), lambda b: (b, 0, 0)))
        args.append(attention_mask.astype(jnp.float32))
    in_specs += [w_spec, w_spec, w_spec, b_spec, b_spec, b_spec]
    args += [wq_t, wk_t, wv_t, bq2, bk2, bv2]

    out = pl.pallas_call(
        kernel,
        out_shape=jax.ShapeDtypeStruct((B, S, H), q_in.dtype),
        grid_spec=pltpu.PrefetchScalarGridSpec(
            num_scalar_prefetch=0,
            grid=(B,),
            in_specs=in_specs,
            out_specs=act_spec,
        ),
        compiler_params=pltpu.CompilerParams(
            dimension_semantics=("parallel",),
            vmem_limit_bytes=64 * 1024 * 1024,
        ),
    )(*args)
    return out


def reference_self_attention(q_in, k_in, v_in, params, num_heads, attention_mask=None):
    """Pure-JAX reference mirroring the PyTorch forward (eval mode)."""
    B, S, H = q_in.shape
    D = H // num_heads
    wq, bq, wk, bk, wv, bv = params

    def proj(x, w, b):
        return x @ w.T + b

    def split_heads(x):  # (B, S, H) -> (B, nH, S, D)
        return x.reshape(B, S, num_heads, D).transpose(0, 2, 1, 3)

    q = split_heads(proj(q_in, wq, bq))
    k = split_heads(proj(k_in, wk, bk))
    v = split_heads(proj(v_in, wv, bv))

    scores = jnp.einsum("bhqd,bhkd->bhqk", q, k) / math.sqrt(D)
    if attention_mask is not None:
        scores = scores + attention_mask[:, None, :, :]
    probs = jax.nn.softmax(scores, axis=-1)
    ctx = jnp.einsum("bhqk,bhkd->bhqd", probs, v)
    return ctx.transpose(0, 2, 1, 3).reshape(B, S, H)


if __name__ == "__main__":
    B, S, H = 2, 8, 32
    NUM_HEADS = 4

    key = jax.random.PRNGKey(0)
    k_q, k_k, k_v, k_wq, k_wk, k_wv, k_bq, k_bk, k_bv, k_m = jax.random.split(key, 10)

    q_in = jax.random.normal(k_q, (B, S, H), dtype=jnp.float32)
    k_in = jax.random.normal(k_k, (B, S, H), dtype=jnp.float32)
    v_in = jax.random.normal(k_v, (B, S, H), dtype=jnp.float32)

    # Deterministic parameter init (shapes match nn.Linear(hidden, hidden)).
    bound = 1.0 / math.sqrt(H)
    wq = jax.random.uniform(k_wq, (H, H), minval=-bound, maxval=bound, dtype=jnp.float32)
    wk = jax.random.uniform(k_wk, (H, H), minval=-bound, maxval=bound, dtype=jnp.float32)
    wv = jax.random.uniform(k_wv, (H, H), minval=-bound, maxval=bound, dtype=jnp.float32)
    bq = jax.random.uniform(k_bq, (H,), minval=-bound, maxval=bound, dtype=jnp.float32)
    bk = jax.random.uniform(k_bk, (H,), minval=-bound, maxval=bound, dtype=jnp.float32)
    bv = jax.random.uniform(k_bv, (H,), minval=-bound, maxval=bound, dtype=jnp.float32)
    params = (wq, bq, wk, bk, wv, bv)

    # Optional additive attention mask (B, S, S).
    mask = jnp.where(jax.random.uniform(k_m, (B, S, S)) > 0.2, 0.0, -1e9).astype(jnp.float32)

    ref_masked = reference_self_attention(q_in, k_in, v_in, params, NUM_HEADS,
                                          attention_mask=mask)
    ref_nomask = reference_self_attention(q_in, k_in, v_in, params, NUM_HEADS,
                                          attention_mask=None)

    # Default (bf16 MXU) path, with and without a mask.
    out_bf16_m = jax.block_until_ready(
        self_attention(q_in, k_in, v_in, params, NUM_HEADS, attention_mask=mask))
    out_bf16_n = jax.block_until_ready(
        self_attention(q_in, k_in, v_in, params, NUM_HEADS, attention_mask=None))

    # Float32 path for a tight numerical check against the f32 reference.
    out_f32_m = jax.block_until_ready(
        self_attention(q_in, k_in, v_in, params, NUM_HEADS, attention_mask=mask,
                       compute_dtype=jnp.float32))

    assert out_bf16_m.shape == (B, S, H)
    assert out_bf16_n.shape == (B, S, H)
    assert out_f32_m.shape == (B, S, H)

    assert jnp.allclose(out_f32_m, ref_masked, atol=1e-4, rtol=1e-4), \
        "f32 kernel mismatch vs reference"
    assert jnp.allclose(out_bf16_m, ref_masked, atol=5e-2, rtol=5e-2), \
        "bf16 kernel (masked) mismatch vs reference"
    assert jnp.allclose(out_bf16_n, ref_nomask, atol=5e-2, rtol=5e-2), \
        "bf16 kernel (no mask) mismatch vs reference"

    print("KERNEL_OK")
</pallas_src>

<mosaic_0001>
module attributes {stable_mosaic.version = 11 : i64} {
  func.func @_self_attention_kernel(%arg0: i32, %arg1: memref<1x8x32xf32, #tpu.memory_space<vmem>>, %arg2: memref<1x8x32xf32, #tpu.memory_space<vmem>>, %arg3: memref<1x8x32xf32, #tpu.memory_space<vmem>>, %arg4: memref<1x8x8xf32, #tpu.memory_space<vmem>>, %arg5: memref<32x32xbf16, #tpu.memory_space<vmem>>, %arg6: memref<32x32xbf16, #tpu.memory_space<vmem>>, %arg7: memref<32x32xbf16, #tpu.memory_space<vmem>>, %arg8: memref<1x32xf32, #tpu.memory_space<vmem>>, %arg9: memref<1x32xf32, #tpu.memory_space<vmem>>, %arg10: memref<1x32xf32, #tpu.memory_space<vmem>>, %arg11: memref<1x8x32xf32, #tpu.memory_space<vmem>>) attributes {dimension_semantics = [#tpu.dimension_semantics<parallel>], iteration_bounds = array<i64: 2>, scalar_prefetch = 0 : i64, scratch_operands = 0 : i64, tpu.core_type = #tpu.core_type<tc>, window_params = [{transform_indices = @transform_0, window_bounds = array<i64: 1, 8, 32>}, {transform_indices = @transform_1, window_bounds = array<i64: 1, 8, 32>}, {transform_indices = @transform_2, window_bounds = array<i64: 1, 8, 32>}, {transform_indices = @transform_3, window_bounds = array<i64: 1, 8, 8>}, {pipeline_mode = #tpu.pipeline_mode<synchronous>, transform_indices = @transform_4, window_bounds = array<i64: 32, 32>}, {pipeline_mode = #tpu.pipeline_mode<synchronous>, transform_indices = @transform_5, window_bounds = array<i64: 32, 32>}, {pipeline_mode = #tpu.pipeline_mode<synchronous>, transform_indices = @transform_6, window_bounds = array<i64: 32, 32>}, {pipeline_mode = #tpu.pipeline_mode<synchronous>, transform_indices = @transform_7, window_bounds = array<i64: 1, 32>}, {pipeline_mode = #tpu.pipeline_mode<synchronous>, transform_indices = @transform_8, window_bounds = array<i64: 1, 32>}, {pipeline_mode = #tpu.pipeline_mode<synchronous>, transform_indices = @transform_9, window_bounds = array<i64: 1, 32>}, {transform_indices = @transform_10, window_bounds = array<i64: 1, 8, 32>}]} {
    %c0 = arith.constant 0 : index
    %c0_0 = arith.constant 0 : index
    %c0_1 = arith.constant 0 : index
    %0 = vector.load %arg1[%c0, %c0_0, %c0_1] : memref<1x8x32xf32, #tpu.memory_space<vmem>>, vector<1x8x32xf32>
    %1 = vector.shape_cast %0 : vector<1x8x32xf32> to vector<8x32xf32>
    %2 = arith.truncf %1 : vector<8x32xf32> to vector<8x32xbf16>
    %c0_2 = arith.constant 0 : index
    %c0_3 = arith.constant 0 : index
    %c0_4 = arith.constant 0 : index
    %3 = vector.load %arg2[%c0_2, %c0_3, %c0_4] : memref<1x8x32xf32, #tpu.memory_space<vmem>>, vector<1x8x32xf32>
    %4 = vector.shape_cast %3 : vector<1x8x32xf32> to vector<8x32xf32>
    %5 = arith.truncf %4 : vector<8x32xf32> to vector<8x32xbf16>
    %c0_5 = arith.constant 0 : index
    %c0_6 = arith.constant 0 : index
    %c0_7 = arith.constant 0 : index
    %6 = vector.load %arg3[%c0_5, %c0_6, %c0_7] : memref<1x8x32xf32, #tpu.memory_space<vmem>>, vector<1x8x32xf32>
    %7 = vector.shape_cast %6 : vector<1x8x32xf32> to vector<8x32xf32>
    %8 = arith.truncf %7 : vector<8x32xf32> to vector<8x32xbf16>
    %c0_8 = arith.constant 0 : index
    %c0_9 = arith.constant 0 : index
    %9 = vector.load %arg5[%c0_8, %c0_9] : memref<32x32xbf16, #tpu.memory_space<vmem>>, vector<32x32xbf16>
    %cst = arith.constant dense<0.000000e+00> : vector<8x32xf32>
    %10 = tpu.matmul %2, %9, %cst {dimension_numbers = #tpu.dot_dimension_numbers<[1], [0], [0], [1], [0, 0, 1, 1], [], []>} : vector<8x32xbf16>, vector<32x32xbf16>, vector<8x32xf32> -> vector<8x32xf32>
    %c0_10 = arith.constant 0 : index
    %c0_11 = arith.constant 0 : index
    %11 = vector.load %arg8[%c0_10, %c0_11] : memref<1x32xf32, #tpu.memory_space<vmem>>, vector<1x32xf32>
    %12 = vector.broadcast %11 : vector<1x32xf32> to vector<8x32xf32>
    %13 = arith.addf %10, %12 : vector<8x32xf32>
    %c0_12 = arith.constant 0 : index
    %c0_13 = arith.constant 0 : index
    %14 = vector.load %arg6[%c0_12, %c0_13] : memref<32x32xbf16, #tpu.memory_space<vmem>>, vector<32x32xbf16>
    %cst_14 = arith.constant dense<0.000000e+00> : vector<8x32xf32>
    %15 = tpu.matmul %5, %14, %cst_14 {dimension_numbers = #tpu.dot_dimension_numbers<[1], [0], [0], [1], [0, 0, 1, 1], [], []>} : vector<8x32xbf16>, vector<32x32xbf16>, vector<8x32xf32> -> vector<8x32xf32>
    %c0_15 = arith.constant 0 : index
    %c0_16 = arith.constant 0 : index
    %16 = vector.load %arg9[%c0_15, %c0_16] : memref<1x32xf32, #tpu.memory_space<vmem>>, vector<1x32xf32>
    %17 = vector.broadcast %16 : vector<1x32xf32> to vector<8x32xf32>
    %18 = arith.addf %15, %17 : vector<8x32xf32>
    %c0_17 = arith.constant 0 : index
    %c0_18 = arith.constant 0 : index
    %19 = vector.load %arg7[%c0_17, %c0_18] : memref<32x32xbf16, #tpu.memory_space<vmem>>, vector<32x32xbf16>
    %cst_19 = arith.constant dense<0.000000e+00> : vector<8x32xf32>
    %20 = tpu.matmul %8, %19, %cst_19 {dimension_numbers = #tpu.dot_dimension_numbers<[1], [0], [0], [1], [0, 0, 1, 1], [], []>} : vector<8x32xbf16>, vector<32x32xbf16>, vector<8x32xf32> -> vector<8x32xf32>
    %c0_20 = arith.constant 0 : index
    %c0_21 = arith.constant 0 : index
    %21 = vector.load %arg10[%c0_20, %c0_21] : memref<1x32xf32, #tpu.memory_space<vmem>>, vector<1x32xf32>
    %22 = vector.broadcast %21 : vector<1x32xf32> to vector<8x32xf32>
    %23 = arith.addf %20, %22 : vector<8x32xf32>
    %cst_22 = arith.constant 0.353553385 : f32
    %24 = vector.broadcast %cst_22 : f32 to vector<8x32xf32>
    %25 = arith.mulf %13, %24 : vector<8x32xf32>
    %26 = arith.truncf %25 : vector<8x32xf32> to vector<8x32xbf16>
    %27 = arith.truncf %18 : vector<8x32xf32> to vector<8x32xbf16>
    %28 = arith.truncf %23 : vector<8x32xf32> to vector<8x32xbf16>
    %c0_23 = arith.constant 0 : index
    %c0_24 = arith.constant 0 : index
    %c0_25 = arith.constant 0 : index
    %29 = vector.load %arg4[%c0_23, %c0_24, %c0_25] : memref<1x8x8xf32, #tpu.memory_space<vmem>>, vector<1x8x8xf32>
    %30 = vector.shape_cast %29 : vector<1x8x8xf32> to vector<8x8xf32>
    %31 = vector.extract_strided_slice %26 {offsets = [0, 0], sizes = [8, 8], strides = [1, 1]} : vector<8x32xbf16> to vector<8x8xbf16>
    %32 = vector.extract_strided_slice %27 {offsets = [0, 0], sizes = [8, 8], strides = [1, 1]} : vector<8x32xbf16> to vector<8x8xbf16>
    %33 = vector.extract_strided_slice %28 {offsets = [0, 0], sizes = [8, 8], strides = [1, 1]} : vector<8x32xbf16> to vector<8x8xbf16>
    %cst_26 = arith.constant dense<0.000000e+00> : vector<8x8xf32>
    %34 = tpu.matmul %31, %32, %cst_26 {dimension_numbers = #tpu.dot_dimension_numbers<[1], [1], [0], [0], [0, 0, 1, 0], [], []>} : vector<8x8xbf16>, vector<8x8xbf16>, vector<8x8xf32> -> vector<8x8xf32>
    %35 = arith.addf %34, %30 : vector<8x8xf32>
    %cst_27 = arith.constant dense<0xFF800000> : vector<8xf32>
    %36 = vector.multi_reduction <maximumf>, %35, %cst_27 [1] : vector<8x8xf32> to vector<8xf32>
    %37 = vector.shape_cast %36 : vector<8xf32> to vector<8x1xf32>
    %38 = vector.broadcast %37 : vector<8x1xf32> to vector<8x8xf32>
    %39 = arith.subf %35, %38 : vector<8x8xf32>
    %40 = math.exp %39 : vector<8x8xf32>
    %cst_28 = arith.constant dense<0.000000e+00> : vector<8xf32>
    %41 = vector.multi_reduction <add>, %40, %cst_28 [1] : vector<8x8xf32> to vector<8xf32>
    %42 = vector.shape_cast %41 : vector<8xf32> to vector<8x1xf32>
    %43 = tpu.reciprocal %42 {approx = true} : vector<8x1xf32> -> vector<8x1xf32>
    %44 = vector.broadcast %43 : vector<8x1xf32> to vector<8x8xf32>
    %45 = arith.mulf %40, %44 : vector<8x8xf32>
    %46 = arith.truncf %45 : vector<8x8xf32> to vector<8x8xbf16>
    %cst_29 = arith.constant dense<0.000000e+00> : vector<8x8xf32>
    %47 = tpu.matmul %46, %33, %cst_29 {dimension_numbers = #tpu.dot_dimension_numbers<[1], [0], [0], [1], [0, 0, 1, 1], [], []>} : vector<8x8xbf16>, vector<8x8xbf16>, vector<8x8xf32> -> vector<8x8xf32>
    %48 = vector.extract_strided_slice %26 {offsets = [0, 8], sizes = [8, 8], strides = [1, 1]} : vector<8x32xbf16> to vector<8x8xbf16>
    %49 = vector.extract_strided_slice %27 {offsets = [0, 8], sizes = [8, 8], strides = [1, 1]} : vector<8x32xbf16> to vector<8x8xbf16>
    %50 = vector.extract_strided_slice %28 {offsets = [0, 8], sizes = [8, 8], strides = [1, 1]} : vector<8x32xbf16> to vector<8x8xbf16>
    %cst_30 = arith.constant dense<0.000000e+00> : vector<8x8xf32>
    %51 = tpu.matmul %48, %49, %cst_30 {dimension_numbers = #tpu.dot_dimension_numbers<[1], [1], [0], [0], [0, 0, 1, 0], [], []>} : vector<8x8xbf16>, vector<8x8xbf16>, vector<8x8xf32> -> vector<8x8xf32>
    %52 = arith.addf %51, %30 : vector<8x8xf32>
    %cst_31 = arith.constant dense<0xFF800000> : vector<8xf32>
    %53 = vector.multi_reduction <maximumf>, %52, %cst_31 [1] : vector<8x8xf32> to vector<8xf32>
    %54 = vector.shape_cast %53 : vector<8xf32> to vector<8x1xf32>
    %55 = vector.broadcast %54 : vector<8x1xf32> to vector<8x8xf32>
    %56 = arith.subf %52, %55 : vector<8x8xf32>
    %57 = math.exp %56 : vector<8x8xf32>
    %cst_32 = arith.constant dense<0.000000e+00> : vector<8xf32>
    %58 = vector.multi_reduction <add>, %57, %cst_32 [1] : vector<8x8xf32> to vector<8xf32>
    %59 = vector.shape_cast %58 : vector<8xf32> to vector<8x1xf32>
    %60 = tpu.reciprocal %59 {approx = true} : vector<8x1xf32> -> vector<8x1xf32>
    %61 = vector.broadcast %60 : vector<8x1xf32> to vector<8x8xf32>
    %62 = arith.mulf %57, %61 : vector<8x8xf32>
    %63 = arith.truncf %62 : vector<8x8xf32> to vector<8x8xbf16>
    %cst_33 = arith.constant dense<0.000000e+00> : vector<8x8xf32>
    %64 = tpu.matmul %63, %50, %cst_33 {dimension_numbers = #tpu.dot_dimension_numbers<[1], [0], [0], [1], [0, 0, 1, 1], [], []>} : vector<8x8xbf16>, vector<8x8xbf16>, vector<8x8xf32> -> vector<8x8xf32>
    %65 = vector.extract_strided_slice %26 {offsets = [0, 16], sizes = [8, 8], strides = [1, 1]} : vector<8x32xbf16> to vector<8x8xbf16>
    %66 = vector.extract_strided_slice %27 {offsets = [0, 16], sizes = [8, 8], strides = [1, 1]} : vector<8x32xbf16> to vector<8x8xbf16>
    %67 = vector.extract_strided_slice %28 {offsets = [0, 16], sizes = [8, 8], strides = [1, 1]} : vector<8x32xbf16> to vector<8x8xbf16>
    %cst_34 = arith.constant dense<0.000000e+00> : vector<8x8xf32>
    %68 = tpu.matmul %65, %66, %cst_34 {dimension_numbers = #tpu.dot_dimension_numbers<[1], [1], [0], [0], [0, 0, 1, 0], [], []>} : vector<8x8xbf16>, vector<8x8xbf16>, vector<8x8xf32> -> vector<8x8xf32>
    %69 = arith.addf %68, %30 : vector<8x8xf32>
    %cst_35 = arith.constant dense<0xFF800000> : vector<8xf32>
    %70 = vector.multi_reduction <maximumf>, %69, %cst_35 [1] : vector<8x8xf32> to vector<8xf32>
    %71 = vector.shape_cast %70 : vector<8xf32> to vector<8x1xf32>
    %72 = vector.broadcast %71 : vector<8x1xf32> to vector<8x8xf32>
    %73 = arith.subf %69, %72 : vector<8x8xf32>
    %74 = math.exp %73 : vector<8x8xf32>
    %cst_36 = arith.constant dense<0.000000e+00> : vector<8xf32>
    %75 = vector.multi_reduction <add>, %74, %cst_36 [1] : vector<8x8xf32> to vector<8xf32>
    %76 = vector.shape_cast %75 : vector<8xf32> to vector<8x1xf32>
    %77 = tpu.reciprocal %76 {approx = true} : vector<8x1xf32> -> vector<8x1xf32>
    %78 = vector.broadcast %77 : vector<8x1xf32> to vector<8x8xf32>
    %79 = arith.mulf %74, %78 : vector<8x8xf32>
    %80 = arith.truncf %79 : vector<8x8xf32> to vector<8x8xbf16>
    %cst_37 = arith.constant dense<0.000000e+00> : vector<8x8xf32>
    %81 = tpu.matmul %80, %67, %cst_37 {dimension_numbers = #tpu.dot_dimension_numbers<[1], [0], [0], [1], [0, 0, 1, 1], [], []>} : vector<8x8xbf16>, vector<8x8xbf16>, vector<8x8xf32> -> vector<8x8xf32>
    %82 = vector.extract_strided_slice %26 {offsets = [0, 24], sizes = [8, 8], strides = [1, 1]} : vector<8x32xbf16> to vector<8x8xbf16>
    %83 = vector.extract_strided_slice %27 {offsets = [0, 24], sizes = [8, 8], strides = [1, 1]} : vector<8x32xbf16> to vector<8x8xbf16>
    %84 = vector.extract_strided_slice %28 {offsets = [0, 24], sizes = [8, 8], strides = [1, 1]} : vector<8x32xbf16> to vector<8x8xbf16>
    %cst_38 = arith.constant dense<0.000000e+00> : vector<8x8xf32>
    %85 = tpu.matmul %82, %83, %cst_38 {dimension_numbers = #tpu.dot_dimension_numbers<[1], [1], [0], [0], [0, 0, 1, 0], [], []>} : vector<8x8xbf16>, vector<8x8xbf16>, vector<8x8xf32> -> vector<8x8xf32>
    %86 = arith.addf %85, %30 : vector<8x8xf32>
    %cst_39 = arith.constant dense<0xFF800000> : vector<8xf32>
    %87 = vector.multi_reduction <maximumf>, %86, %cst_39 [1] : vector<8x8xf32> to vector<8xf32>
    %88 = vector.shape_cast %87 : vector<8xf32> to vector<8x1xf32>
    %89 = vector.broadcast %88 : vector<8x1xf32> to vector<8x8xf32>
    %90 = arith.subf %86, %89 : vector<8x8xf32>
    %91 = math.exp %90 : vector<8x8xf32>
    %cst_40 = arith.constant dense<0.000000e+00> : vector<8xf32>
    %92 = vector.multi_reduction <add>, %91, %cst_40 [1] : vector<8x8xf32> to vector<8xf32>
    %93 = vector.shape_cast %92 : vector<8xf32> to vector<8x1xf32>
    %94 = tpu.reciprocal %93 {approx = true} : vector<8x1xf32> -> vector<8x1xf32>
    %95 = vector.broadcast %94 : vector<8x1xf32> to vector<8x8xf32>
    %96 = arith.mulf %91, %95 : vector<8x8xf32>
    %97 = arith.truncf %96 : vector<8x8xf32> to vector<8x8xbf16>
    %cst_41 = arith.constant dense<0.000000e+00> : vector<8x8xf32>
    %98 = tpu.matmul %97, %84, %cst_41 {dimension_numbers = #tpu.dot_dimension_numbers<[1], [0], [0], [1], [0, 0, 1, 1], [], []>} : vector<8x8xbf16>, vector<8x8xbf16>, vector<8x8xf32> -> vector<8x8xf32>
    %99 = tpu.concatenate %47, %64, %81, %98 in 1 : vector<8x8xf32>, vector<8x8xf32>, vector<8x8xf32>, vector<8x8xf32> -> vector<8x32xf32>
    %c0_42 = arith.constant 0 : index
    %c0_43 = arith.constant 0 : index
    %c0_44 = arith.constant 0 : index
    %100 = vector.load %arg11[%c0_42, %c0_43, %c0_44] : memref<1x8x32xf32, #tpu.memory_space<vmem>>, vector<1x8x32xf32>
    %101 = vector.shape_cast %100 : vector<1x8x32xf32> to vector<8x32xf32>
    %102 = vector.shape_cast %99 : vector<8x32xf32> to vector<1x8x32xf32>
    tpu.vector_store %arg11[%c0_42, %c0_43, %c0_44], %102 {strides = array<i32>} : memref<1x8x32xf32, #tpu.memory_space<vmem>>, vector<1x8x32xf32>,
    return
  }
  func.func @transform_0(%arg0: i32) -> (i32, i32, i32) {
    %c0_i32 = arith.constant 0 : i32
    %c0_i32_0 = arith.constant 0 : i32
    %c0_i32_1 = arith.constant 0 : i32
    return %arg0, %c0_i32, %c0_i32_0 : i32, i32, i32
  }
  func.func @transform_1(%arg0: i32) -> (i32, i32, i32) {
    %c0_i32 = arith.constant 0 : i32
    %c0_i32_0 = arith.constant 0 : i32
    %c0_i32_1 = arith.constant 0 : i32
    return %arg0, %c0_i32, %c0_i32_0 : i32, i32, i32
  }
  func.func @transform_2(%arg0: i32) -> (i32, i32, i32) {
    %c0_i32 = arith.constant 0 : i32
    %c0_i32_0 = arith.constant 0 : i32
    %c0_i32_1 = arith.constant 0 : i32
    return %arg0, %c0_i32, %c0_i32_0 : i32, i32, i32
  }
  func.func @transform_3(%arg0: i32) -> (i32, i32, i32) {
    %c0_i32 = arith.constant 0 : i32
    %c0_i32_0 = arith.constant 0 : i32
    %c0_i32_1 = arith.constant 0 : i32
    return %arg0, %c0_i32, %c0_i32_0 : i32, i32, i32
  }
  func.func @transform_4(%arg0: i32) -> (i32, i32) {
    %c0_i32 = arith.constant 0 : i32
    %c0_i32_0 = arith.constant 0 : i32
    %c0_i32_1 = arith.constant 0 : i32
    return %c0_i32, %c0_i32_0 : i32, i32
  }
  func.func @transform_5(%arg0: i32) -> (i32, i32) {
    %c0_i32 = arith.constant 0 : i32
    %c0_i32_0 = arith.constant 0 : i32
    %c0_i32_1 = arith.constant 0 : i32
    return %c0_i32, %c0_i32_0 : i32, i32
  }
  func.func @transform_6(%arg0: i32) -> (i32, i32) {
    %c0_i32 = arith.constant 0 : i32
    %c0_i32_0 = arith.constant 0 : i32
    %c0_i32_1 = arith.constant 0 : i32
    return %c0_i32, %c0_i32_0 : i32, i32
  }
  func.func @transform_7(%arg0: i32) -> (i32, i32) {
    %c0_i32 = arith.constant 0 : i32
    %c0_i32_0 = arith.constant 0 : i32
    %c0_i32_1 = arith.constant 0 : i32
    return %c0_i32, %c0_i32_0 : i32, i32
  }
  func.func @transform_8(%arg0: i32) -> (i32, i32) {
    %c0_i32 = arith.constant 0 : i32
    %c0_i32_0 = arith.constant 0 : i32
    %c0_i32_1 = arith.constant 0 : i32
    return %c0_i32, %c0_i32_0 : i32, i32
  }
  func.func @transform_9(%arg0: i32) -> (i32, i32) {
    %c0_i32 = arith.constant 0 : i32
    %c0_i32_0 = arith.constant 0 : i32
    %c0_i32_1 = arith.constant 0 : i32
    return %c0_i32, %c0_i32_0 : i32, i32
  }
  func.func @transform_10(%arg0: i32) -> (i32, i32, i32) {
    %c0_i32 = arith.constant 0 : i32
    %c0_i32_0 = arith.constant 0 : i32
    %c0_i32_1 = arith.constant 0 : i32
    return %arg0, %c0_i32, %c0_i32_0 : i32, i32, i32
  }
}

</mosaic_0001>

<llo_original>
// kernel: tpu_custom_call.1
$region0: #{tpu_custom_call.1}
  #allocation0 [shape = 'u32[]', space=smem, size = 0x4, offset = 0x4, fixed_abs, tag = 'smem constant byte address 0x4 - core index']
  #allocation1 [shape = 'u32[72,128]{1,0:T(1,128)}', space=vmem, size = 0x9000, scoped, tag = 'internal scratch']
  %s0 = inlined_call_operand.hbm [shape: f32[2,8,32], index: 0, kind: input, shape index: {}]
  %s1 = inlined_call_operand.hbm [shape: f32[2,8,32], index: 1, kind: input, shape index: {}]
  %s2 = inlined_call_operand.hbm [shape: f32[2,8,32], index: 2, kind: input, shape index: {}]
  %s3 = inlined_call_operand.hbm [shape: f32[2,8,8], index: 3, kind: input, shape index: {}]
  %s4 = inlined_call_operand.hbm [shape: bf16[32,32], index: 4, kind: input, shape index: {}]
  %s5 = inlined_call_operand.hbm [shape: bf16[32,32], index: 5, kind: input, shape index: {}]
  %s6 = inlined_call_operand.hbm [shape: bf16[32,32], index: 6, kind: input, shape index: {}]
  %s7 = inlined_call_operand.vmem [shape: f32[1,32], index: 7, kind: input, shape index: {}]
  %s8 = inlined_call_operand.vmem [shape: f32[1,32], index: 8, kind: input, shape index: {}]
  %s9 = inlined_call_operand.vmem [shape: f32[1,32], index: 9, kind: input, shape index: {}]
  %s10 = inlined_call_operand.hbm [shape: f32[2,8,32], index: 10, kind: output, shape index: {}]
  %s11 = sld [smem:[#allocation0]]
  $region101: #{tpu_custom_call.1} parent=0
    _
  %s13 = ssub.s32 1, %s11
  %s14 = scalar_select 0, %s13, %s11
  $region1: #{tpu_custom_call.1} parent=0
    #allocation2 [shape = 'u8[8192]{0}', space=vmem, size = 0x2000, scoped, tag = 'input window, operand 0']
    #allocation3 [shape = 's32[2]{0}', space=sflag, size = 0x8, scoped, tag = 'scoped memory for tpu_custom_call.1']
    #allocation4 [shape = 's32[2]{0}', space=sflag, size = 0x8, scoped, tag = 'scoped memory for tpu_custom_call.1']
    #allocation5 [shape = 'u8[8192]{0}', space=vmem, size = 0x2000, scoped, tag = 'input window, operand 1']
    #allocation6 [shape = 's32[2]{0}', space=sflag, size = 0x8, scoped, tag = 'scoped memory for tpu_custom_call.1']
    #allocation7 [shape = 'u8[8192]{0}', space=vmem, size = 0x2000, scoped, tag = 'input window, operand 2']
    #allocation8 [shape = 'u8[8192]{0}', space=vmem, size = 0x2000, scoped, tag = 'input window, operand 3']
    #allocation9 [shape = 's32[2]{0}', space=sflag, size = 0x8, scoped, tag = 'scoped memory for tpu_custom_call.1']
    #allocation10 [shape = 'u8[8192]{0}', space=vmem, size = 0x2000, scoped, tag = 'input window, operand 4, single buffered']
    #allocation11 [shape = 'u8[8192]{0}', space=vmem, size = 0x2000, scoped, tag = 'input window, operand 5, single buffered']
    #allocation12 [shape = 's32[1]{0}', space=sflag, size = 0x4, scoped, tag = 'scoped memory for tpu_custom_call.1']
    #allocation13 [shape = 'u8[8192]{0}', space=vmem, size = 0x2000, scoped, tag = 'input window, operand 6, single buffered']
    #allocation14 [shape = 'u8[8192]{0}', space=vmem, size = 0x2000, scoped, tag = 'output window, operand 0']
    %15 = vsyncpa [#allocation3], 0
    %s16 = scalar_lea.sflag [#allocation3], 1
    %17 = vsyncpa %s16, 0
    %18 = vsyncpa [#allocation6], 0
    %s19 = scalar_lea.sflag [#allocation6], 1
    %20 = vsyncpa %s19, 0
    %21 = vsyncpa [#allocation9], 0
    %s22 = scalar_lea.sflag [#allocation9], 1
    %23 = vsyncpa %s22, 0
    %24 = vsyncpa [#allocation12], 0
    %25 = vsyncpa [#allocation4], 0
    %s26 = scalar_lea.sflag [#allocation4], 1
    %27 = vsyncpa %s26, 0
    loop: start=0, step=1, limit=4
    $region2: #{tpu_custom_call.1} parent=1 // loop_pre_header
      _
    $region3: #{tpu_custom_call.1} parent=1 // loop_header
      %s29 = sphi 0, %s33
      %p30 = scmp.ge.s32.totalorder %s29, 4
      %s39 = sphi 0, %s41
      %s42 = sphi 0, %s39
      %s43 = sphi 0, %s42
      %s59 = sphi 0, %s43
      %s65 = sphi 0, %s67
      %s68 = sphi 0, %s65
      %s69 = sphi 0, %s68
      %s85 = sphi 0, %s69
      %s91 = sphi 0, %s93
      %s94 = sphi 0, %s91
      %s95 = sphi 0, %s94
      %s111 = sphi 0, %s95
      %s117 = sphi 0, %s119
      %s120 = sphi 0, %s117
      %s121 = sphi 0, %s120
      %s137 = sphi 0, %s121
      %s141 = sphi 0, %s141
      %s143 = sphi 0, %s141
      %s144 = sphi 0, %s143
      %s158 = sphi 0, %s144
      %s162 = sphi 0, %s162
      %s164 = sphi 0, %s162
      %s165 = sphi 0, %s164
      %s179 = sphi 0, %s165
      %s183 = sphi 0, %s183
      %s185 = sphi 0, %s183
      %s186 = sphi 0, %s185
      %s200 = sphi 0, %s186
      %s204 = sphi 0, %s204
      %s206 = sphi 0, %s204
      %s207 = sphi 0, %s206
      %s221 = sphi 0, %s207
      %s225 = sphi 0, %s225
      %s227 = sphi 0, %s225
      %s228 = sphi 0, %s227
      %s242 = sphi 0, %s228
      %s246 = sphi 0, %s246
      %s248 = sphi 0, %s246
      %s249 = sphi 0, %s248
      %s263 = sphi 0, %s249
      %s269 = sphi 0, %s271
      %s272 = sphi 0, %s269
      %s273 = sphi 0, %s272
      %s289 = sphi 0, %s273
    $region4: #{tpu_custom_call.1} parent=1 // loop_header_branch
      %32 = sbr.rel (%p30) target = $region8
    $region5: #{tpu_custom_call.1} parent=1 // loop_body
      %s34 = ssub.s32 %s29, 1
      %s35 = ssub.s32 %s29, 2
      %s36 = sadd.s32 %s29, 1
      %s37 = ssub.s32 %s29, %s36
      %p38 = scmp.eq.s32.totalorder %s37, 0
      %s40 = sadd.s32 %s39, 1
      %s41 = scalar_select %p38, %s39, %s40
      %p44 = pneg %p38
      %p45 = scmp.eq.s32.totalorder %s29, 1
      %p46 = por %p44, %p45
      %p47 = scmp.ne.s32.totalorder %s39, %s42
      %p48 = scmp.eq.s32.totalorder %s29, 0
      %p49 = por %p47, %p48
      %p50 = scmp.ne.s32.totalorder %s39, %s42
      %p51 = scmp.eq.s32.totalorder %s34, 1
      %p52 = por %p50, %p51
      %p53 = scmp.ne.s32.totalorder %s42, %s43
      %p54 = scmp.eq.s32.totalorder %s34, 0
      %p55 = por %p53, %p54
      %p56 = scmp.ne.s32.totalorder %s42, %s43
      %p57 = scmp.eq.s32.totalorder %s35, 1
      %p58 = por %p56, %p57
      %p60 = scmp.ne.s32.totalorder %s43, %s59
      %p61 = scmp.eq.s32.totalorder %s35, 0
      %p62 = por %p60, %p61
      %s63 = ssub.s32 %s29, %s36
      %p64 = scmp.eq.s32.totalorder %s63, 0
      %s66 = sadd.s32 %s65, 1
      %s67 = scalar_select %p64, %s65, %s66
      %p70 = pneg %p64
      %p71 = scmp.eq.s32.totalorder %s29, 1
      %p72 = por %p70, %p71
      %p73 = scmp.ne.s32.totalorder %s65, %s68
      %p74 = scmp.eq.s32.totalorder %s29, 0
      %p75 = por %p73, %p74
      %p76 = scmp.ne.s32.totalorder %s65, %s68
      %p77 = scmp.eq.s32.totalorder %s34, 1
      %p78 = por %p76, %p77
      %p79 = scmp.ne.s32.totalorder %s68, %s69
      %p80 = scmp.eq.s32.totalorder %s34, 0
      %p81 = por %p79, %p80
      %p82 = scmp.ne.s32.totalorder %s68, %s69
      %p83 = scmp.eq.s32.totalorder %s35, 1
      %p84 = por %p82, %p83
      %p86 = scmp.ne.s32.totalorder %s69, %s85
      %p87 = scmp.eq.s32.totalorder %s35, 0
      %p88 = por %p86, %p87
      %s89 = ssub.s32 %s29, %s36
      %p90 = scmp.eq.s32.totalorder %s89, 0
      %s92 = sadd.s32 %s91, 1
      %s93 = scalar_select %p90, %s91, %s92
      %p96 = pneg %p90
      %p97 = scmp.eq.s32.totalorder %s29, 1
      %p98 = por %p96, %p97
      %p99 = scmp.ne.s32.totalorder %s91, %s94
      %p100 = scmp.eq.s32.totalorder %s29, 0
      %p101 = por %p99, %p100
      %p102 = scmp.ne.s32.totalorder %s91, %s94
      %p103 = scmp.eq.s32.totalorder %s34, 1
      %p104 = por %p102, %p103
      %p105 = scmp.ne.s32.totalorder %s94, %s95
      %p106 = scmp.eq.s32.totalorder %s34, 0
      %p107 = por %p105, %p106
      %p108 = scmp.ne.s32.totalorder %s94, %s95
      %p109 = scmp.eq.s32.totalorder %s35, 1
      %p110 = por %p108, %p109
      %p112 = scmp.ne.s32.totalorder %s95, %s111
      %p113 = scmp.eq.s32.totalorder %s35, 0
      %p114 = por %p112, %p113
      %s115 = ssub.s32 %s29, %s36
      %p116 = scmp.eq.s32.totalorder %s115, 0
      %s118 = sadd.s32 %s117, 1
      %s119 = scalar_select %p116, %s117, %s118
      %p122 = pneg %p116
      %p123 = scmp.eq.s32.totalorder %s29, 1
      %p124 = por %p122, %p123
      %p125 = scmp.ne.s32.totalorder %s117, %s120
      %p126 = scmp.eq.s32.totalorder %s29, 0
      %p127 = por %p125, %p126
      %p128 = scmp.ne.s32.totalorder %s117, %s120
      %p129 = scmp.eq.s32.totalorder %s34, 1
      %p130 = por %p128, %p129
      %p131 = scmp.ne.s32.totalorder %s120, %s121
      %p132 = scmp.eq.s32.totalorder %s34, 0
      %p133 = por %p131, %p132
      %p134 = scmp.ne.s32.totalorder %s120, %s121
      %p135 = scmp.eq.s32.totalorder %s35, 1
      %p136 = por %p134, %p135
      %p138 = scmp.ne.s32.totalorder %s121, %s137
      %p139 = scmp.eq.s32.totalorder %s35, 0
      %p140 = por %p138, %p139
      %s142 = sadd.s32 %s141, 1
      %p145 = scmp.eq.s32.totalorder %s29, 1
      %p146 = scmp.ne.s32.totalorder %s141, %s143
      %p147 = scmp.eq.s32.totalorder %s29, 0
      %p148 = por %p146, %p147
      %p149 = scmp.ne.s32.totalorder %s141, %s143
      %p150 = scmp.eq.s32.totalorder %s34, 1
      %p151 = por %p149, %p150
      %p152 = scmp.ne.s32.totalorder %s143, %s144
      %p153 = scmp.eq.s32.totalorder %s34, 0
      %p154 = por %p152, %p153
      %p155 = scmp.ne.s32.totalorder %s143, %s144
      %p156 = scmp.eq.s32.totalorder %s35, 1
      %p157 = por %p155, %p156
      %p159 = scmp.ne.s32.totalorder %s144, %s158
      %p160 = scmp.eq.s32.totalorder %s35, 0
      %p161 = por %p159, %p160
      %s163 = sadd.s32 %s162, 1
      %p166 = scmp.eq.s32.totalorder %s29, 1
      %p167 = scmp.ne.s32.totalorder %s162, %s164
      %p168 = scmp.eq.s32.totalorder %s29, 0
      %p169 = por %p167, %p168
      %p170 = scmp.ne.s32.totalorder %s162, %s164
      %p171 = scmp.eq.s32.totalorder %s34, 1
      %p172 = por %p170, %p171
      %p173 = scmp.ne.s32.totalorder %s164, %s165
      %p174 = scmp.eq.s32.totalorder %s34, 0
      %p175 = por %p173, %p174
      %p176 = scmp.ne.s32.totalorder %s164, %s165
      %p177 = scmp.eq.s32.totalorder %s35, 1
      %p178 = por %p176, %p177
      %p180 = scmp.ne.s32.totalorder %s165, %s179
      %p181 = scmp.eq.s32.totalorder %s35, 0
      %p182 = por %p180, %p181
      %s184 = sadd.s32 %s183, 1
      %p187 = scmp.eq.s32.totalorder %s29, 1
      %p188 = scmp.ne.s32.totalorder %s183, %s185
      %p189 = scmp.eq.s32.totalorder %s29, 0
      %p190 = por %p188, %p189
      %p191 = scmp.ne.s32.totalorder %s183, %s185
      %p192 = scmp.eq.s32.totalorder %s34, 1
      %p193 = por %p191, %p192
      %p194 = scmp.ne.s32.totalorder %s185, %s186
      %p195 = scmp.eq.s32.totalorder %s34, 0
      %p196 = por %p194, %p195
      %p197 = scmp.ne.s32.totalorder %s185, %s186
      %p198 = scmp.eq.s32.totalorder %s35, 1
      %p199 = por %p197, %p198
      %p201 = scmp.ne.s32.totalorder %s186, %s200
      %p202 = scmp.eq.s32.totalorder %s35, 0
      %p203 = por %p201, %p202
      %s205 = sadd.s32 %s204, 1
      %p208 = scmp.eq.s32.totalorder %s29, 1
      %p209 = scmp.ne.s32.totalorder %s204, %s206
      %p210 = scmp.eq.s32.totalorder %s29, 0
      %p211 = por %p209, %p210
      %p212 = scmp.ne.s32.totalorder %s204, %s206
      %p213 = scmp.eq.s32.totalorder %s34, 1
      %p214 = por %p212, %p213
      %p215 = scmp.ne.s32.totalorder %s206, %s207
      %p216 = scmp.eq.s32.totalorder %s34, 0
      %p217 = por %p215, %p216
      %p218 = scmp.ne.s32.totalorder %s206, %s207
      %p219 = scmp.eq.s32.totalorder %s35, 1
      %p220 = por %p218, %p219
      %p222 = scmp.ne.s32.totalorder %s207, %s221
      %p223 = scmp.eq.s32.totalorder %s35, 0
      %p224 = por %p222, %p223
      %s226 = sadd.s32 %s225, 1
      %p229 = scmp.eq.s32.totalorder %s29, 1
      %p230 = scmp.ne.s32.totalorder %s225, %s227
      %p231 = scmp.eq.s32.totalorder %s29, 0
      %p232 = por %p230, %p231
      %p233 = scmp.ne.s32.totalorder %s225, %s227
      %p234 = scmp.eq.s32.totalorder %s34, 1
      %p235 = por %p233, %p234
      %p236 = scmp.ne.s32.totalorder %s227, %s228
      %p237 = scmp.eq.s32.totalorder %s34, 0
      %p238 = por %p236, %p237
      %p239 = scmp.ne.s32.totalorder %s227, %s228
      %p240 = scmp.eq.s32.totalorder %s35, 1
      %p241 = por %p239, %p240
      %p243 = scmp.ne.s32.totalorder %s228, %s242
      %p244 = scmp.eq.s32.totalorder %s35, 0
      %p245 = por %p243, %p244
      %s247 = sadd.s32 %s246, 1
      %p250 = scmp.eq.s32.totalorder %s29, 1
      %p251 = scmp.ne.s32.totalorder %s246, %s248
      %p252 = scmp.eq.s32.totalorder %s29, 0
      %p253 = por %p251, %p252
      %p254 = scmp.ne.s32.totalorder %s246, %s248
      %p255 = scmp.eq.s32.totalorder %s34, 1
      %p256 = por %p254, %p255
      %p257 = scmp.ne.s32.totalorder %s248, %s249
      %p258 = scmp.eq.s32.totalorder %s34, 0
      %p259 = por %p257, %p258
      %p260 = scmp.ne.s32.totalorder %s248, %s249
      %p261 = scmp.eq.s32.totalorder %s35, 1
      %p262 = por %p260, %p261
      %p264 = scmp.ne.s32.totalorder %s249, %s263
      %p265 = scmp.eq.s32.totalorder %s35, 0
      %p266 = por %p264, %p265
      %s267 = ssub.s32 %s29, %s36
      %p268 = scmp.eq.s32.totalorder %s267, 0
      %s270 = sadd.s32 %s269, 1
      %s271 = scalar_select %p268, %s269, %s270
      %p274 = pneg %p268
      %p275 = scmp.eq.s32.totalorder %s29, 1
      %p276 = por %p274, %p275
      %p277 = scmp.ne.s32.totalorder %s269, %s272
      %p278 = scmp.eq.s32.totalorder %s29, 0
      %p279 = por %p277, %p278
      %p280 = scmp.ne.s32.totalorder %s269, %s272
      %p281 = scmp.eq.s32.totalorder %s34, 1
      %p282 = por %p280, %p281
      %p283 = scmp.ne.s32.totalorder %s272, %s273
      %p284 = scmp.eq.s32.totalorder %s34, 0
      %p285 = por %p283, %p284
      %p286 = scmp.ne.s32.totalorder %s272, %s273
      %p287 = scmp.eq.s32.totalorder %s35, 1
      %p288 = por %p286, %p287
      %p290 = scmp.ne.s32.totalorder %s273, %s289
      %p291 = scmp.eq.s32.totalorder %s35, 0
      %p292 = por %p290, %p291
      %p293 = scmp.le.s32.totalorder 1, %s29
      %p294 = scmp.lt.s32.totalorder %s29, 3
      %p295 = pnand %p293, %p294
      %p296 = pneg %p295
      // Predicated region
      $region9: #{tpu_custom_call.1} parent=5 // pred_check
        _
      $region10: #{tpu_custom_call.1} parent=5 // pred_check_branch
        %298 = sbr.rel (%p295) target = $region12
      $region11: #{tpu_custom_call.1} parent=5 // pred_region
        %s299 = ssub.s32 %s29, 1
        // Predicated region
        $region13: #{tpu_custom_call.1} parent=11 // pred_check
          %p300 = pneg %p154
        $region14: #{tpu_custom_call.1} parent=11 // pred_check_branch
          %302 = sbr.rel (%p300) target = $region16
        $region15: #{tpu_custom_call.1} parent=11 // pred_region
          %304 = vsyncadd [#allocation9], 0
          %s305 = sshll.u32 %s4, 4
          %s306 = int_to_ptr.hbm [resolvable:$true] %s305
          %s307 = sshll.u32 [#allocation10], 4
          %s308 = int_to_ptr.vmem [resolvable:$true] %s307
          %313 = dma.hbm_to_vmem [thread:$0]  %s306, 256, %s308, [#allocation9], 64, 64, 4
        $region16: #{tpu_custom_call.1} parent=11 // pred_fallthru
          _
        // Predicated region
        $region17: #{tpu_custom_call.1} parent=11 // pred_check
          %p314 = pneg %p175
        $region18: #{tpu_custom_call.1} parent=11 // pred_check_branch
          %316 = sbr.rel (%p314) target = $region20
        $region19: #{tpu_custom_call.1} parent=11 // pred_region
          %318 = vsyncadd [#allocation12], 0
          %s319 = sshll.u32 %s5, 4
          %s320 = int_to_ptr.hbm [resolvable:$true] %s319
          %s321 = sshll.u32 [#allocation11], 4
          %s322 = int_to_ptr.vmem [resolvable:$true] %s321
          %327 = dma.hbm_to_vmem [thread:$0]  %s320, 256, %s322, [#allocation12], 64, 64, 4
        $region20: #{tpu_custom_call.1} parent=11 // pred_fallthru
          _
        // Predicated region
        $region21: #{tpu_custom_call.1} parent=11 // pred_check
          %p328 = pneg %p196
        $region22: #{tpu_custom_call.1} parent=11 // pred_check_branch
          %330 = sbr.rel (%p328) target = $region24
        $region23: #{tpu_custom_call.1} parent=11 // pred_region
          %332 = vsyncadd [#allocation12], 0
          %s333 = sshll.u32 %s6, 4
          %s334 = int_to_ptr.hbm [resolvable:$true] %s333
          %s335 = sshll.u32 [#allocation13], 4
          %s336 = int_to_ptr.vmem [resolvable:$true] %s335
          %341 = dma.hbm_to_vmem [thread:$0]  %s334, 256, %s336, [#allocation12], 64, 64, 4
        $region24: #{tpu_custom_call.1} parent=11 // pred_fallthru
          _
        // Predicated region
        $region25: #{tpu_custom_call.1} parent=11 // pred_check
          %p342 = pneg %p217
        $region26: #{tpu_custom_call.1} parent=11 // pred_check_branch
          %344 = sbr.rel (%p342) target = $region28
        $region27: #{tpu_custom_call.1} parent=11 // pred_region
          _
        $region28: #{tpu_custom_call.1} parent=11 // pred_fallthru
          _
        // Predicated region
        $region29: #{tpu_custom_call.1} parent=11 // pred_check
          %p345 = pneg %p238
        $region30: #{tpu_custom_call.1} parent=11 // pred_check_branch
          %347 = sbr.rel (%p345) target = $region32
        $region31: #{tpu_custom_call.1} parent=11 // pred_region
          _
        $region32: #{tpu_custom_call.1} parent=11 // pred_fallthru
          _
        // Predicated region
        $region33: #{tpu_custom_call.1} parent=11 // pred_check
          %p348 = pneg %p259
        $region34: #{tpu_custom_call.1} parent=11 // pred_check_branch
          %350 = sbr.rel (%p348) target = $region36
        $region35: #{tpu_custom_call.1} parent=11 // pred_region
          _
        $region36: #{tpu_custom_call.1} parent=11 // pred_fallthru
          _
      $region12: #{tpu_custom_call.1} parent=5 // pred_fallthru
        _
      %p351 = scmp.lt.s32.totalorder %s29, 2
      // Predicated region
      $region37: #{tpu_custom_call.1} parent=5 // pred_check
        %p352 = pneg %p351
      $region38: #{tpu_custom_call.1} parent=5 // pred_check_branch
        %354 = sbr.rel (%p352) target = $region40
      $region39: #{tpu_custom_call.1} parent=5 // pred_region
        // Predicated region
        $region41: #{tpu_custom_call.1} parent=39 // pred_check
          %p355 = pneg %p49
        $region42: #{tpu_custom_call.1} parent=39 // pred_check_branch
          %357 = sbr.rel (%p355) target = $region44
        $region43: #{tpu_custom_call.1} parent=39 // pred_region
          %s358 = sand.u32 %s39, 1
          %s359 = scalar_lea.sflag [#allocation3], %s358
          %s360 = sand.u32 %s39, 1
          %s361 = smul.addr %s360, 8
          %s362 = scalar_lea.vmem [#allocation2], %s361
          %364 = vsyncadd %s359, 0
          %s365 = smul.addr %s29, 8
          %s366 = scalar_lea.hbm %s0, %s365
          %s368 = sshll.u32 %s366, 4
          %s369 = int_to_ptr.hbm [resolvable:$true] %s368
          %s370 = sshll.u32 %s362, 4
          %s371 = int_to_ptr.vmem [resolvable:$true] %s370
          %373 = dma.hbm_to_vmem [thread:$0]  %s369, 128, %s371, %s359
        $region44: #{tpu_custom_call.1} parent=39 // pred_fallthru
          _
        // Predicated region
        $region45: #{tpu_custom_call.1} parent=39 // pred_check
          %p374 = pneg %p75
        $region46: #{tpu_custom_call.1} parent=39 // pred_check_branch
          %376 = sbr.rel (%p374) target = $region48
        $region47: #{tpu_custom_call.1} parent=39 // pred_region
          %s377 = sand.u32 %s29, 1
          %s378 = scalar_lea.sflag [#allocation6], %s377
          %s379 = sand.u32 %s65, 1
          %s380 = smul.addr %s379, 8
          %s381 = scalar_lea.vmem [#allocation5], %s380
          %383 = vsyncadd %s378, 0
          %s384 = smul.addr %s29, 8
          %s385 = scalar_lea.hbm %s1, %s384
          %s387 = sshll.u32 %s385, 4
          %s388 = int_to_ptr.hbm [resolvable:$true] %s387
          %s389 = sshll.u32 %s381, 4
          %s390 = int_to_ptr.vmem [resolvable:$true] %s389
          %392 = dma.hbm_to_vmem [thread:$0]  %s388, 128, %s390, %s378
        $region48: #{tpu_custom_call.1} parent=39 // pred_fallthru
          _
        // Predicated region
        $region49: #{tpu_custom_call.1} parent=39 // pred_check
          %p393 = pneg %p101
        $region50: #{tpu_custom_call.1} parent=39 // pred_check_branch
          %395 = sbr.rel (%p393) target = $region52
        $region51: #{tpu_custom_call.1} parent=39 // pred_region
          %s396 = sand.u32 %s29, 1
          %s397 = scalar_lea.sflag [#allocation6], %s396
          %s398 = sand.u32 %s91, 1
          %s399 = smul.addr %s398, 8
          %s400 = scalar_lea.vmem [#allocation7], %s399
          %402 = vsyncadd %s397, 0
          %s403 = smul.addr %s29, 8
          %s404 = scalar_lea.hbm %s2, %s403
          %s406 = sshll.u32 %s404, 4
          %s407 = int_to_ptr.hbm [resolvable:$true] %s406
          %s408 = sshll.u32 %s400, 4
          %s409 = int_to_ptr.vmem [resolvable:$true] %s408
          %411 = dma.hbm_to_vmem [thread:$0]  %s407, 128, %s409, %s397
        $region52: #{tpu_custom_call.1} parent=39 // pred_fallthru
          _
        // Predicated region
        $region53: #{tpu_custom_call.1} parent=39 // pred_check
          %p412 = pneg %p127
        $region54: #{tpu_custom_call.1} parent=39 // pred_check_branch
          %414 = sbr.rel (%p412) target = $region56
        $region55: #{tpu_custom_call.1} parent=39 // pred_region
          %s415 = sand.u32 %s29, 1
          %s416 = scalar_lea.sflag [#allocation9], %s415
          %s417 = sand.u32 %s117, 1
          %s418 = smul.addr %s417, 8
          %s419 = scalar_lea.vmem [#allocation8], %s418
          %421 = vsyncadd %s416, 0
          %s422 = smul.addr %s29, 8
          %s423 = scalar_lea.hbm %s3, %s422
          %s425 = sshll.u32 %s423, 4
          %s426 = int_to_ptr.hbm [resolvable:$true] %s425
          %s427 = sshll.u32 %s419, 4
          %s428 = int_to_ptr.vmem [resolvable:$true] %s427
          %430 = dma.hbm_to_vmem [thread:$0]  %s426, 128, %s428, %s416
        $region56: #{tpu_custom_call.1} parent=39 // pred_fallthru
          _
      $region40: #{tpu_custom_call.1} parent=5 // pred_fallthru
        _
      %p431 = scmp.le.s32.totalorder 1, %s29
      %p432 = scmp.lt.s32.totalorder %s29, 3
      %p433 = pnand %p431, %p432
      %p434 = pneg %p433
      // Predicated region
      $region57: #{tpu_custom_call.1} parent=5 // pred_check
        _
      $region58: #{tpu_custom_call.1} parent=5 // pred_check_branch
        %436 = sbr.rel (%p433) target = $region60
      $region59: #{tpu_custom_call.1} parent=5 // pred_region
        %s437 = ssub.s32 %s29, 1
        %s438 = sand.u32 %s42, 1
        %s439 = scalar_lea.sflag [#allocation3], %s438
        %s440 = sand.u32 %s42, 1
        %s441 = smul.addr %s440, 8
        %s442 = scalar_lea.vmem [#allocation2], %s441
        // Predicated region
        $region61: #{tpu_custom_call.1} parent=59 // pred_check
          %p443 = pneg %p55
        $region62: #{tpu_custom_call.1} parent=59 // pred_check_branch
          %445 = sbr.rel (%p443) target = $region64
        $region63: #{tpu_custom_call.1} parent=59 // pred_region
          %447 = dma.done %s439, 128
        $region64: #{tpu_custom_call.1} parent=59 // pred_fallthru
          _
        %s448 = sand.u32 %s34, 1
        %s449 = scalar_lea.sflag [#allocation6], %s448
        %s450 = sand.u32 %s68, 1
        %s451 = smul.addr %s450, 8
        %s452 = scalar_lea.vmem [#allocation5], %s451
        // Predicated region
        $region65: #{tpu_custom_call.1} parent=59 // pred_check
          %p453 = pneg %p81
        $region66: #{tpu_custom_call.1} parent=59 // pred_check_branch
          %455 = sbr.rel (%p453) target = $region68
        $region67: #{tpu_custom_call.1} parent=59 // pred_region
          %457 = dma.done %s449, 128
        $region68: #{tpu_custom_call.1} parent=59 // pred_fallthru
          _
        %s458 = sand.u32 %s34, 1
        %s459 = scalar_lea.sflag [#allocation6], %s458
        %s460 = sand.u32 %s94, 1
        %s461 = smul.addr %s460, 8
        %s462 = scalar_lea.vmem [#allocation7], %s461
        // Predicated region
        $region69: #{tpu_custom_call.1} parent=59 // pred_check
          %p463 = pneg %p107
        $region70: #{tpu_custom_call.1} parent=59 // pred_check_branch
          %465 = sbr.rel (%p463) target = $region72
        $region71: #{tpu_custom_call.1} parent=59 // pred_region
          %467 = dma.done %s459, 128
        $region72: #{tpu_custom_call.1} parent=59 // pred_fallthru
          _
        %s468 = sand.u32 %s34, 1
        %s469 = scalar_lea.sflag [#allocation9], %s468
        %s470 = sand.u32 %s120, 1
        %s471 = smul.addr %s470, 8
        %s472 = scalar_lea.vmem [#allocation8], %s471
        // Predicated region
        $region73: #{tpu_custom_call.1} parent=59 // pred_check
          %p473 = pneg %p133
        $region74: #{tpu_custom_call.1} parent=59 // pred_check_branch
          %475 = sbr.rel (%p473) target = $region76
        $region75: #{tpu_custom_call.1} parent=59 // pred_region
          %477 = dma.done %s469, 128
        $region76: #{tpu_custom_call.1} parent=59 // pred_fallthru
          _
        // Predicated region
        $region77: #{tpu_custom_call.1} parent=59 // pred_check
          %p478 = pneg %p154
        $region78: #{tpu_custom_call.1} parent=59 // pred_check_branch
          %480 = sbr.rel (%p478) target = $region80
        $region79: #{tpu_custom_call.1} parent=59 // pred_region
          %482 = dma.done [#allocation9], 256
        $region80: #{tpu_custom_call.1} parent=59 // pred_fallthru
          _
        // Predicated region
        $region81: #{tpu_custom_call.1} parent=59 // pred_check
          %p483 = pneg %p175
        $region82: #{tpu_custom_call.1} parent=59 // pred_check_branch
          %485 = sbr.rel (%p483) target = $region84
        $region83: #{tpu_custom_call.1} parent=59 // pred_region
          %487 = dma.done [#allocation12], 256
        $region84: #{tpu_custom_call.1} parent=59 // pred_fallthru
          _
        // Predicated region
        $region85: #{tpu_custom_call.1} parent=59 // pred_check
          %p488 = pneg %p196
        $region86: #{tpu_custom_call.1} parent=59 // pred_check_branch
          %490 = sbr.rel (%p488) target = $region88
        $region87: #{tpu_custom_call.1} parent=59 // pred_region
          %492 = dma.done [#allocation12], 256
        $region88: #{tpu_custom_call.1} parent=59 // pred_fallthru
          _
        %s493 = sand.u32 %s42, 1
        %s494 = scalar_lea.sflag [#allocation3], %s493
        %s495 = sand.u32 %s42, 1
        %s496 = smul.addr %s495, 8
        %s497 = scalar_lea.vmem [#allocation2], %s496
        %p498 = pneg %p55
        %p499 = pneg %p52
        %s500 = sand.u32 %s34, 1
        %s501 = scalar_lea.sflag [#allocation6], %s500
        %s502 = sand.u32 %s68, 1
        %s503 = smul.addr %s502, 8
        %s504 = scalar_lea.vmem [#allocation5], %s503
        %p505 = pneg %p81
        %p506 = pneg %p78
        %s507 = sand.u32 %s34, 1
        %s508 = scalar_lea.sflag [#allocation6], %s507
        %s509 = sand.u32 %s94, 1
        %s510 = smul.addr %s509, 8
        %s511 = scalar_lea.vmem [#allocation7], %s510
        %p512 = pneg %p107
        %p513 = pneg %p104
        %s514 = sand.u32 %s34, 1
        %s515 = scalar_lea.sflag [#allocation9], %s514
        %s516 = sand.u32 %s120, 1
        %s517 = smul.addr %s516, 8
        %s518 = scalar_lea.vmem [#allocation8], %s517
        %p519 = pneg %p133
        %p520 = pneg %p130
        %p521 = pneg %p154
        %p522 = pneg %p151
        %p523 = pneg %p175
        %p524 = pneg %p172
        %p525 = pneg %p196
        %p526 = pneg %p193
        %p527 = pneg %p217
        %p528 = pneg %p214
        %p529 = pneg %p238
        %p530 = pneg %p235
        %p531 = pneg %p259
        %p532 = pneg %p256
        %p533 = pneg %p285
        %p534 = pneg %p282
        %s535 = sand.u32 %s272, 1
        %s536 = scalar_lea.sflag [#allocation4], %s535
        %s537 = sand.u32 %s272, 1
        %s538 = smul.addr %s537, 8
        %s539 = scalar_lea.vmem [#allocation14], %s538
        %v541 = vld [vmem:[%s442] sm:$0xff]
        %v542 = vpack.c.bf16 %v541, %v541
        %v543 = vld [vmem:[%s452] sm:$0xff]
        %v544 = vpack.c.bf16 %v543, %v543
        %v545 = vld [vmem:[%s462] sm:$0xff]
        %v546 = vpack.c.bf16 %v545, %v545
        %v547 = vld [vmem:[#allocation10] sm:$0xf]
        %v548 = vld [vmem:[#allocation10 + $0x4] sm:$0xf]
        %v549 = vld [vmem:[#allocation10 + $0x8] sm:$0xf]
        %v550 = vld [vmem:[#allocation10 + $0xc] sm:$0xf]
        %v551 = vld [vmem:[%s7] sm:$0x1]
        %v553 = vperm.slane %v551, 0
        %v559 = vunpack.c.l.b16 %v547
        %v560 = vunpack.c.l.b16 %v548
        %v561 = vunpack.c.l.b16 %v549
        %v562 = vunpack.c.l.b16 %v550
        %v563 = vpack.c.b16 %v560, %v559
        %v564 = vpack.c.b16 %v562, %v561
        %vm567 = vcmask 261120
        %v569 = vsel %vm567, %v542, 0
        %571 = vmatpush.bf16.msra.mxu0 0
        %572 = vmatpush.bf16.msra.mxu0 0
        %573 = vmatpush.bf16.msra.mxu0 0
        %574 = vmatpush.bf16.msra.mxu0 0
        %575 = vmatpush.bf16.msra.mxu0 0
        %576 = vmatpush.bf16.msra.mxu0 0
        %577 = vmatpush.bf16.msra.mxu0 %v564
        %578 = vmatpush.bf16.msra.mxu0 %v563
        %579 = vmatmul.bf16.gmra.mxu0 %v569
        %v580 = vpop.f32.mrf.mxu0
        %v581 = vadd.f32 %v553, %v580
        %v582 = vpop.f32.mrf.mxu0
        %583 = vdwg.mxu0
        %v584 = vld [vmem:[#allocation11] sm:$0xf]
        %v585 = vld [vmem:[#allocation11 + $0x4] sm:$0xf]
        %v586 = vld [vmem:[#allocation11 + $0x8] sm:$0xf]
        %v587 = vld [vmem:[#allocation11 + $0xc] sm:$0xf]
        %v588 = vld [vmem:[%s8] sm:$0x1]
        %v590 = vperm.slane %v588, 0
        %v596 = vunpack.c.l.b16 %v584
        %v597 = vunpack.c.l.b16 %v585
        %v598 = vunpack.c.l.b16 %v586
        %v599 = vunpack.c.l.b16 %v587
        %v600 = vpack.c.b16 %v597, %v596
        %v601 = vpack.c.b16 %v599, %v598
        %v605 = vsel %vm567, %v544, 0
        %607 = vmatpush.bf16.msra.mxu0 0
        %608 = vmatpush.bf16.msra.mxu0 0
        %609 = vmatpush.bf16.msra.mxu0 0
        %610 = vmatpush.bf16.msra.mxu0 0
        %611 = vmatpush.bf16.msra.mxu0 0
        %612 = vmatpush.bf16.msra.mxu0 0
        %613 = vmatpush.bf16.msra.mxu0 %v601
        %614 = vmatpush.bf16.msra.mxu0 %v600
        %615 = vmatmul.bf16.gmra.mxu0 %v605
        %v616 = vpop.f32.mrf.mxu0
        %v617 = vadd.f32 %v590, %v616
        %v618 = vpop.f32.mrf.mxu0
        %619 = vdwg.mxu0
        %v620 = vld [vmem:[#allocation13] sm:$0xf]
        %v621 = vld [vmem:[#allocation13 + $0x4] sm:$0xf]
        %v622 = vld [vmem:[#allocation13 + $0x8] sm:$0xf]
        %v623 = vld [vmem:[#allocation13 + $0xc] sm:$0xf]
        %v624 = vld [vmem:[%s9] sm:$0x1]
        %v626 = vperm.slane %v624, 0
        %v632 = vunpack.c.l.b16 %v620
        %v633 = vunpack.c.l.b16 %v621
        %v634 = vunpack.c.l.b16 %v622
        %v635 = vunpack.c.l.b16 %v623
        %v636 = vpack.c.b16 %v633, %v632
        %v637 = vpack.c.b16 %v635, %v634
        %v641 = vsel %vm567, %v546, 0
        %643 = vmatpush.bf16.msra.mxu0 0
        %644 = vmatpush.bf16.msra.mxu0 0
        %645 = vmatpush.bf16.msra.mxu0 0
        %646 = vmatpush.bf16.msra.mxu0 0
        %647 = vmatpush.bf16.msra.mxu0 0
        %648 = vmatpush.bf16.msra.mxu0 0
        %649 = vmatpush.bf16.msra.mxu0 %v637
        %650 = vmatpush.bf16.msra.mxu0 %v636
        %651 = vmatmul.bf16.gmra.mxu0 %v641
        %v652 = vpop.f32.mrf.mxu0
        %v653 = vadd.f32 %v626, %v652
        %v654 = vpop.f32.mrf.mxu0
        %655 = vdwg.mxu0
        %v656 = vmul.f32 %v581, 0.35355338
        %v657 = vpack.c.bf16 %v656, %v656
        %v658 = vpack.c.bf16 %v617, %v617
        %v659 = vpack.c.bf16 %v653, %v653
        %v660 = vld [vmem:[%s472] sm:$0xff]
        %vm661 = vcmask 64512
        %v663 = vsel %vm661, %v657, 0
        %v666 = vsel %vm661, %v658, 0
        %668 = vmatpush.bf16.xpose.msra.mxu0 0
        %669 = vmatpush.bf16.xpose.msra.mxu0 0
        %670 = vmatpush.bf16.xpose.msra.mxu0 0
        %671 = vmatpush.bf16.xpose.msra.mxu0 0
        %672 = vmatpush.bf16.xpose.msra.mxu0 0
        %673 = vmatpush.bf16.xpose.msra.mxu0 0
        %674 = vmatpush.bf16.xpose.msra.mxu0 0
        %675 = vmatpush.bf16.xpose.msra.mxu0 %v666
        %676 = vmatmul.bf16.gmra.mxu0 %v663
        %v677 = vpop.f32.mrf.mxu0
        %v678 = vadd.f32 %v660, %v677
        %v679 = vpop.f32.mrf.mxu0
        %680 = vdwg.mxu0
        %v681 = vsel %vm661, %v678, -inf
        %682 = vmax.xlane.f32.xlu0 %v681
        %v683 = vpop.xlane.xlu0 %682
        %v684 = vsub.f32 %v678, %v683
        %v685 = vmul.f32 %v684, 1.442695
        %v686 = vpow.pop %v685
        %v687 = vsel %vm661, %v686, 0.0
        %688 = vadd.xlane.f32.xlu0 %v687
        %v689 = vpop.xlane.xlu0 %688
        %v690 = vrcp.pop %v689
        %v691 = vmul.f32 %v686, %v690
        %v692 = vpack.c.bf16 %v691, %v691
        %v694 = vsel %vm661, %v692, 0
        %vm696 = vcmask 1043456
        %v698 = vsel %vm696, %v659, 0
        %700 = vmatpush.bf16.msra.mxu0 0
        %701 = vmatpush.bf16.msra.mxu0 0
        %702 = vmatpush.bf16.msra.mxu0 0
        %703 = vmatpush.bf16.msra.mxu0 0
        %704 = vmatpush.bf16.msra.mxu0 0
        %705 = vmatpush.bf16.msra.mxu0 0
        %706 = vmatpush.bf16.msra.mxu0 0
        %707 = vmatpush.bf16.msra.mxu0 %v698
        %708 = vmatmul.bf16.gmra.mxu0 %v694
        %v709 = vpop.f32.mrf.mxu0
        %v710 = vadd.f32 0.0, %v709
        %v711 = vpop.f32.mrf.mxu0
        %712 = vdwg.mxu0
        %v714 = vunpack.c.l.b16 %v657
        %v715 = vpack.c.b16 %v714, %v714
        %716 = vrot.lane.b32.xlu0 %v715, 120
        %v717 = vpop.permute.xlu0 %716
        %v719 = vunpack.c.l.b16 %v658
        %v720 = vpack.c.b16 %v719, %v719
        %721 = vrot.lane.b32.xlu0 %v720, 120
        %v722 = vpop.permute.xlu0 %721
        %v724 = vsel %vm661, %v717, 0
        %v727 = vsel %vm661, %v722, 0
        %729 = vmatpush.bf16.xpose.msra.mxu0 0
        %730 = vmatpush.bf16.xpose.msra.mxu0 0
        %731 = vmatpush.bf16.xpose.msra.mxu0 0
        %732 = vmatpush.bf16.xpose.msra.mxu0 0
        %733 = vmatpush.bf16.xpose.msra.mxu0 0
        %734 = vmatpush.bf16.xpose.msra.mxu0 0
        %735 = vmatpush.bf16.xpose.msra.mxu0 0
        %736 = vmatpush.bf16.xpose.msra.mxu0 %v727
        %737 = vmatmul.bf16.gmra.mxu0 %v724
        %v738 = vpop.f32.mrf.mxu0
        %v739 = vadd.f32 %v660, %v738
        %v740 = vpop.f32.mrf.mxu0
        %741 = vdwg.mxu0
        %v742 = vsel %vm661, %v739, -inf
        %743 = vmax.xlane.f32.xlu0 %v742
        %v744 = vpop.xlane.xlu0 %743
        %v745 = vsub.f32 %v739, %v744
        %v746 = vmul.f32 %v745, 1.442695
        %v747 = vpow.pop %v746
        %v748 = vsel %vm661, %v747, 0.0
        %749 = vadd.xlane.f32.xlu0 %v748
        %v750 = vpop.xlane.xlu0 %749
        %v751 = vrcp.pop %v750
        %v752 = vmul.f32 %v747, %v751
        %v753 = vpack.c.bf16 %v752, %v752
        %v755 = vunpack.c.l.b16 %v659
        %v756 = vpack.c.b16 %v755, %v755
        %757 = vrot.lane.b32.xlu0 %v756, 120
        %v758 = vpop.permute.xlu0 %757
        %v760 = vsel %vm661, %v753, 0
        %v763 = vsel %vm696, %v758, 0
        %765 = vmatpush.bf16.msra.mxu0 0
        %766 = vmatpush.bf16.msra.mxu0 0
        %767 = vmatpush.bf16.msra.mxu0 0
        %768 = vmatpush.bf16.msra.mxu0 0
        %769 = vmatpush.bf16.msra.mxu0 0
        %770 = vmatpush.bf16.msra.mxu0 0
        %771 = vmatpush.bf16.msra.mxu0 0
        %772 = vmatpush.bf16.msra.mxu0 %v763
        %773 = vmatmul.bf16.gmra.mxu0 %v760
        %v774 = vpop.f32.mrf.mxu0
        %v775 = vadd.f32 0.0, %v774
        %v776 = vpop.f32.mrf.mxu0
        %777 = vdwg.mxu0
        %778 = vrot.lane.b32.xlu0 %v715, 112
        %v779 = vpop.permute.xlu0 %778
        %780 = vrot.lane.b32.xlu0 %v720, 112
        %v781 = vpop.permute.xlu0 %780
        %v783 = vsel %vm661, %v779, 0
        %v786 = vsel %vm661, %v781, 0
        %788 = vmatpush.bf16.xpose.msra.mxu0 0
        %789 = vmatpush.bf16.xpose.msra.mxu0 0
        %790 = vmatpush.bf16.xpose.msra.mxu0 0
        %791 = vmatpush.bf16.xpose.msra.mxu0 0
        %792 = vmatpush.bf16.xpose.msra.mxu0 0
        %793 = vmatpush.bf16.xpose.msra.mxu0 0
        %794 = vmatpush.bf16.xpose.msra.mxu0 0
        %795 = vmatpush.bf16.xpose.msra.mxu0 %v786
        %796 = vmatmul.bf16.gmra.mxu0 %v783
        %v797 = vpop.f32.mrf.mxu0
        %v798 = vadd.f32 %v660, %v797
        %v799 = vpop.f32.mrf.mxu0
        %800 = vdwg.mxu0
        %v801 = vsel %vm661, %v798, -inf
        %802 = vmax.xlane.f32.xlu0 %v801
        %v803 = vpop.xlane.xlu0 %802
        %v804 = vsub.f32 %v798, %v803
        %v805 = vmul.f32 %v804, 1.442695
        %v806 = vpow.pop %v805
        %v807 = vsel %vm661, %v806, 0.0
        %808 = vadd.xlane.f32.xlu0 %v807
        %v809 = vpop.xlane.xlu0 %808
        %v810 = vrcp.pop %v809
        %v811 = vmul.f32 %v806, %v810
        %v812 = vpack.c.bf16 %v811, %v811
        %813 = vrot.lane.b32.xlu0 %v756, 112
        %v814 = vpop.permute.xlu0 %813
        %v816 = vsel %vm661, %v812, 0
        %v819 = vsel %vm696, %v814, 0
        %821 = vmatpush.bf16.msra.mxu0 0
        %822 = vmatpush.bf16.msra.mxu0 0
        %823 = vmatpush.bf16.msra.mxu0 0
        %824 = vmatpush.bf16.msra.mxu0 0
        %825 = vmatpush.bf16.msra.mxu0 0
        %826 = vmatpush.bf16.msra.mxu0 0
        %827 = vmatpush.bf16.msra.mxu0 0
        %828 = vmatpush.bf16.msra.mxu0 %v819
        %829 = vmatmul.bf16.gmra.mxu0 %v816
        %v830 = vpop.f32.mrf.mxu0
        %v831 = vadd.f32 0.0, %v830
        %v832 = vpop.f32.mrf.mxu0
        %833 = vdwg.mxu0
        %834 = vrot.lane.b32.xlu0 %v715, 104
        %v835 = vpop.permute.xlu0 %834
        %836 = vrot.lane.b32.xlu0 %v720, 104
        %v837 = vpop.permute.xlu0 %836
        %v839 = vsel %vm661, %v835, 0
        %v842 = vsel %vm661, %v837, 0
        %844 = vmatpush.bf16.xpose.msra.mxu0 0
        %845 = vmatpush.bf16.xpose.msra.mxu0 0
        %846 = vmatpush.bf16.xpose.msra.mxu0 0
        %847 = vmatpush.bf16.xpose.msra.mxu0 0
        %848 = vmatpush.bf16.xpose.msra.mxu0 0
        %849 = vmatpush.bf16.xpose.msra.mxu0 0
        %850 = vmatpush.bf16.xpose.msra.mxu0 0
        %851 = vmatpush.bf16.xpose.msra.mxu0 %v842
        %852 = vmatmul.bf16.gmra.mxu0 %v839
        %v853 = vpop.f32.mrf.mxu0
        %v854 = vadd.f32 %v660, %v853
        %v855 = vpop.f32.mrf.mxu0
        %856 = vdwg.mxu0
        %v857 = vsel %vm661, %v854, -inf
        %858 = vmax.xlane.f32.xlu0 %v857
        %v859 = vpop.xlane.xlu0 %858
        %v860 = vsub.f32 %v854, %v859
        %v861 = vmul.f32 %v860, 1.442695
        %v862 = vpow.pop %v861
        %v863 = vsel %vm661, %v862, 0.0
        %864 = vadd.xlane.f32.xlu0 %v863
        %v865 = vpop.xlane.xlu0 %864
        %v866 = vrcp.pop %v865
        %v867 = vmul.f32 %v862, %v866
        %v868 = vpack.c.bf16 %v867, %v867
        %869 = vrot.lane.b32.xlu0 %v756, 104
        %v870 = vpop.permute.xlu0 %869
        %v872 = vsel %vm661, %v868, 0
        %v875 = vsel %vm696, %v870, 0
        %877 = vmatpush.bf16.msra.mxu0 0
        %878 = vmatpush.bf16.msra.mxu0 0
        %879 = vmatpush.bf16.msra.mxu0 0
        %880 = vmatpush.bf16.msra.mxu0 0
        %881 = vmatpush.bf16.msra.mxu0 0
        %882 = vmatpush.bf16.msra.mxu0 0
        %883 = vmatpush.bf16.msra.mxu0 0
        %884 = vmatpush.bf16.msra.mxu0 %v875
        %885 = vmatmul.bf16.gmra.mxu0 %v872
        %v886 = vpop.f32.mrf.mxu0
        %v887 = vadd.f32 0.0, %v886
        %v888 = vpop.f32.mrf.mxu0
        %889 = vdwg.mxu0
        %891 = vrot.lane.b32.xlu0 %v775, 8
        %v892 = vpop.permute.xlu0 %891
        %895 = vrot.lane.b32.xlu0 %v831, 16
        %v896 = vpop.permute.xlu0 %895
        %899 = vrot.lane.b32.xlu0 %v887, 24
        %v900 = vpop.permute.xlu0 %899
        %v902 = vsel %vm661, %v710, %v892
        %vm903 = vcmask 130048
        %v904 = vsel %vm903, %v902, %v896
        %vm905 = vcmask 195584
        %v906 = vsel %vm905, %v904, %v900
        %907 = vst.msk [vmem:[%s539] sm:$0xff] %vm567, %v906
        %s908 = sand.u32 %s272, 1
        %s909 = scalar_lea.sflag [#allocation4], %s908
        %s910 = sand.u32 %s272, 1
        %s911 = smul.addr %s910, 8
        %s912 = scalar_lea.vmem [#allocation14], %s911
        // Predicated region
        $region89: #{tpu_custom_call.1} parent=59 // pred_check
          %p913 = pneg %p282
        $region90: #{tpu_custom_call.1} parent=59 // pred_check_branch
          %915 = sbr.rel (%p913) target = $region92
        $region91: #{tpu_custom_call.1} parent=59 // pred_region
          %917 = vsyncadd %s909, 0
          %s918 = smul.addr %s34, 8
          %s919 = scalar_lea.hbm %s10, %s918
          %s921 = sshll.u32 %s912, 4
          %s922 = int_to_ptr.vmem [resolvable:$true] %s921
          %s923 = sshll.u32 %s919, 4
          %s924 = int_to_ptr.hbm [resolvable:$true] %s923
          %926 = dma.vmem_to_hbm [thread:$0]  %s922, 128, %s924, %s909
        $region92: #{tpu_custom_call.1} parent=59 // pred_fallthru
          _
      $region60: #{tpu_custom_call.1} parent=5 // pred_fallthru
        _
      %p927 = scmp.le.s32.totalorder 2, %s29
      // Predicated region
      $region93: #{tpu_custom_call.1} parent=5 // pred_check
        %p928 = pneg %p927
      $region94: #{tpu_custom_call.1} parent=5 // pred_check_branch
        %930 = sbr.rel (%p928) target = $region96
      $region95: #{tpu_custom_call.1} parent=5 // pred_region
        %s931 = ssub.s32 %s29, 2
        // Predicated region
        $region97: #{tpu_custom_call.1} parent=95 // pred_check
          %p932 = pneg %p288
        $region98: #{tpu_custom_call.1} parent=95 // pred_check_branch
          %934 = sbr.rel (%p932) target = $region100
        $region99: #{tpu_custom_call.1} parent=95 // pred_region
          %s935 = sand.u32 %s273, 1
          %s936 = scalar_lea.sflag [#allocation4], %s935
          %s937 = sand.u32 %s273, 1
          %s938 = smul.addr %s937, 8
          %s939 = scalar_lea.vmem [#allocation14], %s938
          %941 = dma.done %s936, 128
        $region100: #{tpu_custom_call.1} parent=95 // pred_fallthru
          _
      $region96: #{tpu_custom_call.1} parent=5 // pred_fallthru
        _
    $region6: #{tpu_custom_call.1} parent=1 // loop_footer
      %s33 = sadd.s32 1, %s29
    $region7: #{tpu_custom_call.1} parent=1 // loop_footer_branch
      %28 = sbr.rel target = $region3
    $region8: #{tpu_custom_call.1} parent=1 // loop_exit
      _
    %942 = vsyncpa [#allocation3], 1
    %s943 = scalar_lea.sflag [#allocation3], 1
    %944 = vsyncpa %s943, 1
    %945 = vsyncpa [#allocation6], 1
    %s946 = scalar_lea.sflag [#allocation6], 1
    %947 = vsyncpa %s946, 1
    %948 = vsyncpa [#allocation9], 1
    %s949 = scalar_lea.sflag [#allocation9], 1
    %950 = vsyncpa %s949, 1
    %951 = vsyncpa [#allocation12], 1
    %952 = vsyncpa [#allocation4], 1
    %s953 = scalar_lea.sflag [#allocation4], 1
    %954 = vsyncpa %s953, 1

</llo_original>
